<compile_context>
chip_gen: v7x
topology: tpu7x:2x2x1
jax: 0.10.0
libtpu: 0.0.40
codegen_flags: <defaults>
</compile_context>

<pallas_src>
import jax
import jax.numpy as jnp
import numpy as np
from jax.experimental import pallas as pl
from jax.experimental.pallas import tpu as pltpu

H = 12        # LSTM hidden size
LATENT = 12   # latent_dim

# --- packed parameter buffer layout: (_P_ROWS, 4H) f32 ----------------------
_R_WHH   = 0             # rows  0:12 : W_hh forward                  (H, 4H)
_R_WIH_F = 12            # row   12   : W_ih forward                  (1, 4H)
_R_B_F   = 13            # row   13   : b_ih + b_hh forward           (1, 4H)
_R_WIH_B = 14            # row   14   : W_ih reverse                  (1, 4H)
_R_B_B   = 15            # row   15   : b_ih + b_hh reverse           (1, 4H)
_R_WEMB  = 16            # rows 16:40 : [wemb_f ; wemb_b]  in cols 0:12
_R_WMS   = 40            # rows 40:52 : [wmn | wsd]        in cols 0:24
_R_BEMB  = 52            # row   52   : bemb               in cols 0:12
_R_BMS   = 53            # row   53   : [bmn | bsd]        in cols 0:24
_P_ROWS  = 56


def encoder_kernel(act_ref,      # (B, T + LATENT): [x | eps], lane-dense
                   p_ref,        # (56, 4H)        packed parameters
                   out_ref):     # (B, 3*LATENT)   [out | mn | sd]
    B = act_ref.shape[0]
    T = act_ref.shape[1] - LATENT
    f32 = jnp.float32

    # ----- forward-direction LSTM parameters (static slices, offset 0) ------
    whh_f = p_ref[_R_WHH:_R_WHH + H, :]                 # (H, 4H)
    wih_f = p_ref[_R_WIH_F:_R_WIH_F + 1, :]             # (1, 4H)
    b_f   = p_ref[_R_B_F:_R_B_F + 1, :]                 # (1, 4H)

    x_vals = act_ref[:, 0:T]                            # (B, T)  one vreg
    eps    = act_ref[:, T:T + LATENT]                   # (B, LATENT)

    # Input+bias gate contributions: independent of the carry, so they sit off
    # the serial critical path and are hidden under the recurrence by the
    # scheduler.
    pre = [x_vals[:, t:t + 1] * wih_f + b_f for t in range(T)]   # T x (B, 4H)

    h = jnp.zeros((B, H), f32)
    c = jnp.zeros((B, H), f32)

    # Fully unrolled recurrence; (h, c) stay in vregs (no scratch round-trip).
    # PyTorch gate order along the 4H axis: i, f, g, o.
    for t in range(T):
        gates = pre[t] + jnp.dot(h, whh_f, preferred_element_type=f32)  # (B,4H)
        sig = jax.nn.sigmoid(gates)       # one EUP pass covers i, f, o
        tnh = jnp.tanh(gates)             # one EUP pass covers g
        i_g = sig[:, 0:H]
        f_g = sig[:, H:2 * H]
        g_g = tnh[:, 2 * H:3 * H]
        o_g = sig[:, 3 * H:4 * H]
        c = f_g * c + i_g * g_g
        h = o_g * jnp.tanh(c)
    h_fwd = h                                            # (B, H)

    # ----- reverse direction at the last time step ---------------------------
    # h0 = c0 = 0 for the reverse pass at index T-1, so the reverse W_hh term
    # is exactly zero and is skipped (W_hh_reverse is not even packed).
    wih_b = p_ref[_R_WIH_B:_R_WIH_B + 1, :]
    b_b   = p_ref[_R_B_B:_R_B_B + 1, :]
    gates_b = x_vals[:, T - 1:T] * wih_b + b_b           # (B, 4H)
    sig_b = jax.nn.sigmoid(gates_b)
    c_b = sig_b[:, 0:H] * jnp.tanh(gates_b[:, 2 * H:3 * H])
    h_bwd = sig_b[:, 3 * H:4 * H] * jnp.tanh(c_b)        # (B, H)

    # ----- head: Linear(24,12) + ReLU, then mn/sd in one fused dot -----------
    wemb = p_ref[_R_WEMB:_R_WEMB + 2 * H, 0:LATENT]      # (2H, LATENT)
    wms  = p_ref[_R_WMS:_R_WMS + LATENT, 0:2 * LATENT]   # (LATENT, 2*LATENT)
    bemb = p_ref[_R_BEMB:_R_BEMB + 1, 0:LATENT]          # (1, LATENT)
    bms  = p_ref[_R_BMS:_R_BMS + 1, 0:2 * LATENT]        # (1, 2*LATENT)

    hcat = jnp.concatenate([h_fwd, h_bwd], axis=1)       # (B, 2H)
    emb = jnp.maximum(
        jnp.dot(hcat, wemb, preferred_element_type=f32) + bemb, 0.0)

    ms = jnp.dot(emb, wms, preferred_element_type=f32) + bms   # (B, 2*LATENT)
    mn = ms[:, 0:LATENT]
    sd = ms[:, LATENT:2 * LATENT]
    out = eps * jnp.exp(0.5 * sd) + mn

    # Single lane-dense store: [out | mn | sd].
    out_ref[...] = jnp.concatenate([out, mn, sd], axis=1)


def pack_params(p):
    """Pack all (used) parameters into one (56, 4H) f32 buffer.

    Host-side numpy, run ONCE at init (hoisted out of the per-call path).
    The reverse-direction W_hh is intentionally NOT packed (multiplies a
    zero initial state -> contributes nothing to the last-step output).
    """
    P = np.zeros((_P_ROWS, 4 * H), np.float32)
    P[_R_WHH:_R_WHH + H, :] = np.asarray(p["whh_f"])
    P[_R_WIH_F, :] = np.asarray(p["wih_f"][0])
    P[_R_B_F, :] = np.asarray(p["b_f"][0])
    P[_R_WIH_B, :] = np.asarray(p["wih_b"][0])
    P[_R_B_B, :] = np.asarray(p["b_b"][0])
    P[_R_WEMB:_R_WEMB + H, 0:LATENT] = np.asarray(p["wemb_f"])
    P[_R_WEMB + H:_R_WEMB + 2 * H, 0:LATENT] = np.asarray(p["wemb_b"])
    P[_R_WMS:_R_WMS + LATENT, 0:LATENT] = np.asarray(p["wmn"])
    P[_R_WMS:_R_WMS + LATENT, LATENT:2 * LATENT] = np.asarray(p["wsd"])
    P[_R_BEMB, 0:LATENT] = np.asarray(p["bemb"][0])
    P[_R_BMS, 0:LATENT] = np.asarray(p["bmn"][0])
    P[_R_BMS, LATENT:2 * LATENT] = np.asarray(p["bsd"][0])
    return jnp.asarray(P)


@jax.jit
def encoder_forward(x, packed_p, eps):
    """x: (B, T, 1) f32, packed_p: (56, 48) f32, eps: (B, LATENT) f32.

    Returns (out, mn, sd), each (B, LATENT).
    """
    B, T, _ = x.shape
    # One lane-dense activation tile: [x | eps]  ->  2 input DMAs total.
    act = jnp.concatenate([x.reshape(B, T), eps], axis=1)   # (B, T + LATENT)

    vmem = pl.BlockSpec(memory_space=pltpu.MemorySpace.VMEM)
    res = pl.pallas_call(
        encoder_kernel,
        out_shape=jax.ShapeDtypeStruct((B, 3 * LATENT), jnp.float32),
        in_specs=[vmem, vmem],
        out_specs=vmem,
    )(act, packed_p)
    return (res[:, 0:LATENT],
            res[:, LATENT:2 * LATENT],
            res[:, 2 * LATENT:3 * LATENT])


# ---------------------------------------------------------------------------
# Deterministic parameter init (PyTorch-style uniform(-1/sqrt(H), 1/sqrt(H))).
# Biases b_f / b_b correspond to (bias_ih + bias_hh); LSTM/Linear weights are
# stored pre-transposed for right multiplication.
# ---------------------------------------------------------------------------
def init_params(key):
    ks = jax.random.split(key, 11)
    s = 1.0 / float(np.sqrt(H))
    u = lambda k, shape: jax.random.uniform(k, shape, jnp.float32, -s, s)
    return dict(
        wih_f=u(ks[0], (1, 4 * H)),
        whh_f=u(ks[1], (H, 4 * H)),
        b_f=u(ks[2], (1, 4 * H)),
        wih_b=u(ks[3], (1, 4 * H)),
        whh_b=u(ks[4], (H, 4 * H)),     # unused by the kernel (zero state)
        b_b=u(ks[5], (1, 4 * H)),
        wemb_f=u(ks[6], (H, LATENT)),   # rows 0:12 of Linear(24,12).weight^T
        wemb_b=u(ks[7], (H, LATENT)),   # rows 12:24 of Linear(24,12).weight^T
        bemb=u(ks[8], (1, LATENT)),
        wmn=u(ks[9], (LATENT, LATENT)),
        bmn=jnp.zeros((1, LATENT), jnp.float32),
        wsd=u(ks[10], (LATENT, LATENT)),
        bsd=jnp.zeros((1, LATENT), jnp.float32),
    )


# Pure-JAX reference (same math, including the "redundant" reverse W_hh term)
# for a correctness check.
def encoder_ref(x, p, eps):
    B, T, _ = x.shape

    def cell(x_t, h, c, wih, whh, b):
        gates = x_t @ wih + h @ whh + b
        i = jax.nn.sigmoid(gates[:, 0:H])
        f = jax.nn.sigmoid(gates[:, H:2 * H])
        g = jnp.tanh(gates[:, 2 * H:3 * H])
        o = jax.nn.sigmoid(gates[:, 3 * H:4 * H])
        c = f * c + i * g
        h = o * jnp.tanh(c)
        return h, c

    h = jnp.zeros((B, H), jnp.float32)
    c = jnp.zeros((B, H), jnp.float32)
    for t in range(T):
        h, c = cell(x[:, t, :], h, c, p["wih_f"], p["whh_f"], p["b_f"])
    z = jnp.zeros((B, H), jnp.float32)
    hb, _ = cell(x[:, T - 1, :], z, z, p["wih_b"], p["whh_b"], p["b_b"])
    emb = jnp.maximum(h @ p["wemb_f"] + hb @ p["wemb_b"] + p["bemb"], 0.0)
    mn = emb @ p["wmn"] + p["bmn"]
    sd = emb @ p["wsd"] + p["bsd"]
    out = eps * jnp.exp(0.5 * sd) + mn
    return out, mn, sd


if __name__ == "__main__":
    key = jax.random.PRNGKey(0)
    kx, kp, ke = jax.random.split(key, 3)
    B, T = 2, 8

    x = jax.random.normal(kx, (B, T, 1), jnp.float32)
    params = init_params(kp)
    # torch.normal(0, 1, ...) in the reference module -> deterministic
    # host-side noise here so the kernel is reproducible / checkable.
    eps = jax.random.normal(ke, (B, LATENT), jnp.float32)

    # Hoisted: parameters are packed ONCE at init, not per forward call.
    packed_p = pack_params(params)

    out, mn, sd = encoder_forward(x, packed_p, eps)
    jax.block_until_ready((out, mn, sd))

    ref_out, ref_mn, ref_sd = encoder_ref(x, params, eps)
    np.testing.assert_allclose(np.asarray(out), np.asarray(ref_out), atol=1e-4, rtol=1e-4)
    np.testing.assert_allclose(np.asarray(mn), np.asarray(ref_mn), atol=1e-4, rtol=1e-4)
    np.testing.assert_allclose(np.asarray(sd), np.asarray(ref_sd), atol=1e-4, rtol=1e-4)

    print("KERNEL_OK")
</pallas_src>

<mosaic_0001>
module attributes {stable_mosaic.version = 11 : i64} {
  func.func @encoder_kernel(%arg0: memref<2x20xf32, #tpu.memory_space<vmem>>, %arg1: memref<56x48xf32, #tpu.memory_space<vmem>>, %arg2: memref<2x36xf32, #tpu.memory_space<vmem>>) attributes {dimension_semantics = [], scalar_prefetch = 0 : i64, scratch_operands = 0 : i64, tpu.core_type = #tpu.core_type<tc>} {
    %c0 = arith.constant 0 : index
    %c0_0 = arith.constant 0 : index
    %0 = vector.load %arg1[%c0, %c0_0] : memref<56x48xf32, #tpu.memory_space<vmem>>, vector<12x48xf32>
    %c12 = arith.constant 12 : index
    %c0_1 = arith.constant 0 : index
    %1 = vector.load %arg1[%c12, %c0_1] : memref<56x48xf32, #tpu.memory_space<vmem>>, vector<1x48xf32>
    %c13 = arith.constant 13 : index
    %c0_2 = arith.constant 0 : index
    %2 = vector.load %arg1[%c13, %c0_2] : memref<56x48xf32, #tpu.memory_space<vmem>>, vector<1x48xf32>
    %c0_3 = arith.constant 0 : index
    %c0_4 = arith.constant 0 : index
    %3 = vector.load %arg0[%c0_3, %c0_4] : memref<2x20xf32, #tpu.memory_space<vmem>>, vector<2x8xf32>
    %c0_5 = arith.constant 0 : index
    %c8 = arith.constant 8 : index
    %4 = vector.load %arg0[%c0_5, %c8] : memref<2x20xf32, #tpu.memory_space<vmem>>, vector<2x12xf32>
    %5 = vector.extract_strided_slice %3 {offsets = [0, 0], sizes = [2, 1], strides = [1, 1]} : vector<2x8xf32> to vector<2x1xf32>
    %6 = vector.broadcast %5 : vector<2x1xf32> to vector<2x48xf32>
    %7 = vector.broadcast %1 : vector<1x48xf32> to vector<2x48xf32>
    %8 = arith.mulf %6, %7 : vector<2x48xf32>
    %9 = vector.broadcast %2 : vector<1x48xf32> to vector<2x48xf32>
    %10 = arith.addf %8, %9 : vector<2x48xf32>
    %11 = vector.extract_strided_slice %3 {offsets = [0, 1], sizes = [2, 1], strides = [1, 1]} : vector<2x8xf32> to vector<2x1xf32>
    %12 = vector.broadcast %11 : vector<2x1xf32> to vector<2x48xf32>
    %13 = vector.broadcast %1 : vector<1x48xf32> to vector<2x48xf32>
    %14 = arith.mulf %12, %13 : vector<2x48xf32>
    %15 = vector.broadcast %2 : vector<1x48xf32> to vector<2x48xf32>
    %16 = arith.addf %14, %15 : vector<2x48xf32>
    %17 = vector.extract_strided_slice %3 {offsets = [0, 2], sizes = [2, 1], strides = [1, 1]} : vector<2x8xf32> to vector<2x1xf32>
    %18 = vector.broadcast %17 : vector<2x1xf32> to vector<2x48xf32>
    %19 = vector.broadcast %1 : vector<1x48xf32> to vector<2x48xf32>
    %20 = arith.mulf %18, %19 : vector<2x48xf32>
    %21 = vector.broadcast %2 : vector<1x48xf32> to vector<2x48xf32>
    %22 = arith.addf %20, %21 : vector<2x48xf32>
    %23 = vector.extract_strided_slice %3 {offsets = [0, 3], sizes = [2, 1], strides = [1, 1]} : vector<2x8xf32> to vector<2x1xf32>
    %24 = vector.broadcast %23 : vector<2x1xf32> to vector<2x48xf32>
    %25 = vector.broadcast %1 : vector<1x48xf32> to vector<2x48xf32>
    %26 = arith.mulf %24, %25 : vector<2x48xf32>
    %27 = vector.broadcast %2 : vector<1x48xf32> to vector<2x48xf32>
    %28 = arith.addf %26, %27 : vector<2x48xf32>
    %29 = vector.extract_strided_slice %3 {offsets = [0, 4], sizes = [2, 1], strides = [1, 1]} : vector<2x8xf32> to vector<2x1xf32>
    %30 = vector.broadcast %29 : vector<2x1xf32> to vector<2x48xf32>
    %31 = vector.broadcast %1 : vector<1x48xf32> to vector<2x48xf32>
    %32 = arith.mulf %30, %31 : vector<2x48xf32>
    %33 = vector.broadcast %2 : vector<1x48xf32> to vector<2x48xf32>
    %34 = arith.addf %32, %33 : vector<2x48xf32>
    %35 = vector.extract_strided_slice %3 {offsets = [0, 5], sizes = [2, 1], strides = [1, 1]} : vector<2x8xf32> to vector<2x1xf32>
    %36 = vector.broadcast %35 : vector<2x1xf32> to vector<2x48xf32>
    %37 = vector.broadcast %1 : vector<1x48xf32> to vector<2x48xf32>
    %38 = arith.mulf %36, %37 : vector<2x48xf32>
    %39 = vector.broadcast %2 : vector<1x48xf32> to vector<2x48xf32>
    %40 = arith.addf %38, %39 : vector<2x48xf32>
    %41 = vector.extract_strided_slice %3 {offsets = [0, 6], sizes = [2, 1], strides = [1, 1]} : vector<2x8xf32> to vector<2x1xf32>
    %42 = vector.broadcast %41 : vector<2x1xf32> to vector<2x48xf32>
    %43 = vector.broadcast %1 : vector<1x48xf32> to vector<2x48xf32>
    %44 = arith.mulf %42, %43 : vector<2x48xf32>
    %45 = vector.broadcast %2 : vector<1x48xf32> to vector<2x48xf32>
    %46 = arith.addf %44, %45 : vector<2x48xf32>
    %47 = vector.extract_strided_slice %3 {offsets = [0, 7], sizes = [2, 1], strides = [1, 1]} : vector<2x8xf32> to vector<2x1xf32>
    %48 = vector.broadcast %47 : vector<2x1xf32> to vector<2x48xf32>
    %49 = vector.broadcast %1 : vector<1x48xf32> to vector<2x48xf32>
    %50 = arith.mulf %48, %49 : vector<2x48xf32>
    %51 = vector.broadcast %2 : vector<1x48xf32> to vector<2x48xf32>
    %52 = arith.addf %50, %51 : vector<2x48xf32>
    %cst = arith.constant 0.000000e+00 : f32
    %53 = vector.broadcast %cst : f32 to vector<2x12xf32>
    %cst_6 = arith.constant 0.000000e+00 : f32
    %54 = vector.broadcast %cst_6 : f32 to vector<2x12xf32>
    %cst_7 = arith.constant dense<0.000000e+00> : vector<2x48xf32>
    %55 = tpu.matmul %53, %0, %cst_7 {dimension_numbers = #tpu.dot_dimension_numbers<[1], [0], [0], [1], [0, 0, 1, 1], [], []>} : vector<2x12xf32>, vector<12x48xf32>, vector<2x48xf32> -> vector<2x48xf32>
    %56 = arith.addf %10, %55 : vector<2x48xf32>
    %57 = arith.negf %56 : vector<2x48xf32>
    %58 = math.exp %57 : vector<2x48xf32>
    %cst_8 = arith.constant 1.000000e+00 : f32
    %59 = vector.broadcast %cst_8 : f32 to vector<2x48xf32>
    %60 = arith.addf %59, %58 : vector<2x48xf32>
    %61 = arith.divf %59, %60 : vector<2x48xf32>
    %62 = math.tanh %56 : vector<2x48xf32>
    %63 = vector.extract_strided_slice %61 {offsets = [0, 0], sizes = [2, 12], strides = [1, 1]} : vector<2x48xf32> to vector<2x12xf32>
    %64 = vector.extract_strided_slice %61 {offsets = [0, 12], sizes = [2, 12], strides = [1, 1]} : vector<2x48xf32> to vector<2x12xf32>
    %65 = vector.extract_strided_slice %62 {offsets = [0, 24], sizes = [2, 12], strides = [1, 1]} : vector<2x48xf32> to vector<2x12xf32>
    %66 = vector.extract_strided_slice %61 {offsets = [0, 36], sizes = [2, 12], strides = [1, 1]} : vector<2x48xf32> to vector<2x12xf32>
    %67 = arith.mulf %64, %54 : vector<2x12xf32>
    %68 = arith.mulf %63, %65 : vector<2x12xf32>
    %69 = arith.addf %67, %68 : vector<2x12xf32>
    %70 = math.tanh %69 : vector<2x12xf32>
    %71 = arith.mulf %66, %70 : vector<2x12xf32>
    %cst_9 = arith.constant dense<0.000000e+00> : vector<2x48xf32>
    %72 = tpu.matmul %71, %0, %cst_9 {dimension_numbers = #tpu.dot_dimension_numbers<[1], [0], [0], [1], [0, 0, 1, 1], [], []>} : vector<2x12xf32>, vector<12x48xf32>, vector<2x48xf32> -> vector<2x48xf32>
    %73 = arith.addf %16, %72 : vector<2x48xf32>
    %74 = arith.negf %73 : vector<2x48xf32>
    %75 = math.exp %74 : vector<2x48xf32>
    %cst_10 = arith.constant 1.000000e+00 : f32
    %76 = vector.broadcast %cst_10 : f32 to vector<2x48xf32>
    %77 = arith.addf %76, %75 : vector<2x48xf32>
    %78 = arith.divf %76, %77 : vector<2x48xf32>
    %79 = math.tanh %73 : vector<2x48xf32>
    %80 = vector.extract_strided_slice %78 {offsets = [0, 0], sizes = [2, 12], strides = [1, 1]} : vector<2x48xf32> to vector<2x12xf32>
    %81 = vector.extract_strided_slice %78 {offsets = [0, 12], sizes = [2, 12], strides = [1, 1]} : vector<2x48xf32> to vector<2x12xf32>
    %82 = vector.extract_strided_slice %79 {offsets = [0, 24], sizes = [2, 12], strides = [1, 1]} : vector<2x48xf32> to vector<2x12xf32>
    %83 = vector.extract_strided_slice %78 {offsets = [0, 36], sizes = [2, 12], strides = [1, 1]} : vector<2x48xf32> to vector<2x12xf32>
    %84 = arith.mulf %81, %69 : vector<2x12xf32>
    %85 = arith.mulf %80, %82 : vector<2x12xf32>
    %86 = arith.addf %84, %85 : vector<2x12xf32>
    %87 = math.tanh %86 : vector<2x12xf32>
    %88 = arith.mulf %83, %87 : vector<2x12xf32>
    %cst_11 = arith.constant dense<0.000000e+00> : vector<2x48xf32>
    %89 = tpu.matmul %88, %0, %cst_11 {dimension_numbers = #tpu.dot_dimension_numbers<[1], [0], [0], [1], [0, 0, 1, 1], [], []>} : vector<2x12xf32>, vector<12x48xf32>, vector<2x48xf32> -> vector<2x48xf32>
    %90 = arith.addf %22, %89 : vector<2x48xf32>
    %91 = arith.negf %90 : vector<2x48xf32>
    %92 = math.exp %91 : vector<2x48xf32>
    %cst_12 = arith.constant 1.000000e+00 : f32
    %93 = vector.broadcast %cst_12 : f32 to vector<2x48xf32>
    %94 = arith.addf %93, %92 : vector<2x48xf32>
    %95 = arith.divf %93, %94 : vector<2x48xf32>
    %96 = math.tanh %90 : vector<2x48xf32>
    %97 = vector.extract_strided_slice %95 {offsets = [0, 0], sizes = [2, 12], strides = [1, 1]} : vector<2x48xf32> to vector<2x12xf32>
    %98 = vector.extract_strided_slice %95 {offsets = [0, 12], sizes = [2, 12], strides = [1, 1]} : vector<2x48xf32> to vector<2x12xf32>
    %99 = vector.extract_strided_slice %96 {offsets = [0, 24], sizes = [2, 12], strides = [1, 1]} : vector<2x48xf32> to vector<2x12xf32>
    %100 = vector.extract_strided_slice %95 {offsets = [0, 36], sizes = [2, 12], strides = [1, 1]} : vector<2x48xf32> to vector<2x12xf32>
    %101 = arith.mulf %98, %86 : vector<2x12xf32>
    %102 = arith.mulf %97, %99 : vector<2x12xf32>
    %103 = arith.addf %101, %102 : vector<2x12xf32>
    %104 = math.tanh %103 : vector<2x12xf32>
    %105 = arith.mulf %100, %104 : vector<2x12xf32>
    %cst_13 = arith.constant dense<0.000000e+00> : vector<2x48xf32>
    %106 = tpu.matmul %105, %0, %cst_13 {dimension_numbers = #tpu.dot_dimension_numbers<[1], [0], [0], [1], [0, 0, 1, 1], [], []>} : vector<2x12xf32>, vector<12x48xf32>, vector<2x48xf32> -> vector<2x48xf32>
    %107 = arith.addf %28, %106 : vector<2x48xf32>
    %108 = arith.negf %107 : vector<2x48xf32>
    %109 = math.exp %108 : vector<2x48xf32>
    %cst_14 = arith.constant 1.000000e+00 : f32
    %110 = vector.broadcast %cst_14 : f32 to vector<2x48xf32>
    %111 = arith.addf %110, %109 : vector<2x48xf32>
    %112 = arith.divf %110, %111 : vector<2x48xf32>
    %113 = math.tanh %107 : vector<2x48xf32>
    %114 = vector.extract_strided_slice %112 {offsets = [0, 0], sizes = [2, 12], strides = [1, 1]} : vector<2x48xf32> to vector<2x12xf32>
    %115 = vector.extract_strided_slice %112 {offsets = [0, 12], sizes = [2, 12], strides = [1, 1]} : vector<2x48xf32> to vector<2x12xf32>
    %116 = vector.extract_strided_slice %113 {offsets = [0, 24], sizes = [2, 12], strides = [1, 1]} : vector<2x48xf32> to vector<2x12xf32>
    %117 = vector.extract_strided_slice %112 {offsets = [0, 36], sizes = [2, 12], strides = [1, 1]} : vector<2x48xf32> to vector<2x12xf32>
    %118 = arith.mulf %115, %103 : vector<2x12xf32>
    %119 = arith.mulf %114, %116 : vector<2x12xf32>
    %120 = arith.addf %118, %119 : vector<2x12xf32>
    %121 = math.tanh %120 : vector<2x12xf32>
    %122 = arith.mulf %117, %121 : vector<2x12xf32>
    %cst_15 = arith.constant dense<0.000000e+00> : vector<2x48xf32>
    %123 = tpu.matmul %122, %0, %cst_15 {dimension_numbers = #tpu.dot_dimension_numbers<[1], [0], [0], [1], [0, 0, 1, 1], [], []>} : vector<2x12xf32>, vector<12x48xf32>, vector<2x48xf32> -> vector<2x48xf32>
    %124 = arith.addf %34, %123 : vector<2x48xf32>
    %125 = arith.negf %124 : vector<2x48xf32>
    %126 = math.exp %125 : vector<2x48xf32>
    %cst_16 = arith.constant 1.000000e+00 : f32
    %127 = vector.broadcast %cst_16 : f32 to vector<2x48xf32>
    %128 = arith.addf %127, %126 : vector<2x48xf32>
    %129 = arith.divf %127, %128 : vector<2x48xf32>
    %130 = math.tanh %124 : vector<2x48xf32>
    %131 = vector.extract_strided_slice %129 {offsets = [0, 0], sizes = [2, 12], strides = [1, 1]} : vector<2x48xf32> to vector<2x12xf32>
    %132 = vector.extract_strided_slice %129 {offsets = [0, 12], sizes = [2, 12], strides = [1, 1]} : vector<2x48xf32> to vector<2x12xf32>
    %133 = vector.extract_strided_slice %130 {offsets = [0, 24], sizes = [2, 12], strides = [1, 1]} : vector<2x48xf32> to vector<2x12xf32>
    %134 = vector.extract_strided_slice %129 {offsets = [0, 36], sizes = [2, 12], strides = [1, 1]} : vector<2x48xf32> to vector<2x12xf32>
    %135 = arith.mulf %132, %120 : vector<2x12xf32>
    %136 = arith.mulf %131, %133 : vector<2x12xf32>
    %137 = arith.addf %135, %136 : vector<2x12xf32>
    %138 = math.tanh %137 : vector<2x12xf32>
    %139 = arith.mulf %134, %138 : vector<2x12xf32>
    %cst_17 = arith.constant dense<0.000000e+00> : vector<2x48xf32>
    %140 = tpu.matmul %139, %0, %cst_17 {dimension_numbers = #tpu.dot_dimension_numbers<[1], [0], [0], [1], [0, 0, 1, 1], [], []>} : vector<2x12xf32>, vector<12x48xf32>, vector<2x48xf32> -> vector<2x48xf32>
    %141 = arith.addf %40, %140 : vector<2x48xf32>
    %142 = arith.negf %141 : vector<2x48xf32>
    %143 = math.exp %142 : vector<2x48xf32>
    %cst_18 = arith.constant 1.000000e+00 : f32
    %144 = vector.broadcast %cst_18 : f32 to vector<2x48xf32>
    %145 = arith.addf %144, %143 : vector<2x48xf32>
    %146 = arith.divf %144, %145 : vector<2x48xf32>
    %147 = math.tanh %141 : vector<2x48xf32>
    %148 = vector.extract_strided_slice %146 {offsets = [0, 0], sizes = [2, 12], strides = [1, 1]} : vector<2x48xf32> to vector<2x12xf32>
    %149 = vector.extract_strided_slice %146 {offsets = [0, 12], sizes = [2, 12], strides = [1, 1]} : vector<2x48xf32> to vector<2x12xf32>
    %150 = vector.extract_strided_slice %147 {offsets = [0, 24], sizes = [2, 12], strides = [1, 1]} : vector<2x48xf32> to vector<2x12xf32>
    %151 = vector.extract_strided_slice %146 {offsets = [0, 36], sizes = [2, 12], strides = [1, 1]} : vector<2x48xf32> to vector<2x12xf32>
    %152 = arith.mulf %149, %137 : vector<2x12xf32>
    %153 = arith.mulf %148, %150 : vector<2x12xf32>
    %154 = arith.addf %152, %153 : vector<2x12xf32>
    %155 = math.tanh %154 : vector<2x12xf32>
    %156 = arith.mulf %151, %155 : vector<2x12xf32>
    %cst_19 = arith.constant dense<0.000000e+00> : vector<2x48xf32>
    %157 = tpu.matmul %156, %0, %cst_19 {dimension_numbers = #tpu.dot_dimension_numbers<[1], [0], [0], [1], [0, 0, 1, 1], [], []>} : vector<2x12xf32>, vector<12x48xf32>, vector<2x48xf32> -> vector<2x48xf32>
    %158 = arith.addf %46, %157 : vector<2x48xf32>
    %159 = arith.negf %158 : vector<2x48xf32>
    %160 = math.exp %159 : vector<2x48xf32>
    %cst_20 = arith.constant 1.000000e+00 : f32
    %161 = vector.broadcast %cst_20 : f32 to vector<2x48xf32>
    %162 = arith.addf %161, %160 : vector<2x48xf32>
    %163 = arith.divf %161, %162 : vector<2x48xf32>
    %164 = math.tanh %158 : vector<2x48xf32>
    %165 = vector.extract_strided_slice %163 {offsets = [0, 0], sizes = [2, 12], strides = [1, 1]} : vector<2x48xf32> to vector<2x12xf32>
    %166 = vector.extract_strided_slice %163 {offsets = [0, 12], sizes = [2, 12], strides = [1, 1]} : vector<2x48xf32> to vector<2x12xf32>
    %167 = vector.extract_strided_slice %164 {offsets = [0, 24], sizes = [2, 12], strides = [1, 1]} : vector<2x48xf32> to vector<2x12xf32>
    %168 = vector.extract_strided_slice %163 {offsets = [0, 36], sizes = [2, 12], strides = [1, 1]} : vector<2x48xf32> to vector<2x12xf32>
    %169 = arith.mulf %166, %154 : vector<2x12xf32>
    %170 = arith.mulf %165, %167 : vector<2x12xf32>
    %171 = arith.addf %169, %170 : vector<2x12xf32>
    %172 = math.tanh %171 : vector<2x12xf32>
    %173 = arith.mulf %168, %172 : vector<2x12xf32>
    %cst_21 = arith.constant dense<0.000000e+00> : vector<2x48xf32>
    %174 = tpu.matmul %173, %0, %cst_21 {dimension_numbers = #tpu.dot_dimension_numbers<[1], [0], [0], [1], [0, 0, 1, 1], [], []>} : vector<2x12xf32>, vector<12x48xf32>, vector<2x48xf32> -> vector<2x48xf32>
    %175 = arith.addf %52, %174 : vector<2x48xf32>
    %176 = arith.negf %175 : vector<2x48xf32>
    %177 = math.exp %176 : vector<2x48xf32>
    %cst_22 = arith.constant 1.000000e+00 : f32
    %178 = vector.broadcast %cst_22 : f32 to vector<2x48xf32>
    %179 = arith.addf %178, %177 : vector<2x48xf32>
    %180 = arith.divf %178, %179 : vector<2x48xf32>
    %181 = math.tanh %175 : vector<2x48xf32>
    %182 = vector.extract_strided_slice %180 {offsets = [0, 0], sizes = [2, 12], strides = [1, 1]} : vector<2x48xf32> to vector<2x12xf32>
    %183 = vector.extract_strided_slice %180 {offsets = [0, 12], sizes = [2, 12], strides = [1, 1]} : vector<2x48xf32> to vector<2x12xf32>
    %184 = vector.extract_strided_slice %181 {offsets = [0, 24], sizes = [2, 12], strides = [1, 1]} : vector<2x48xf32> to vector<2x12xf32>
    %185 = vector.extract_strided_slice %180 {offsets = [0, 36], sizes = [2, 12], strides = [1, 1]} : vector<2x48xf32> to vector<2x12xf32>
    %186 = arith.mulf %183, %171 : vector<2x12xf32>
    %187 = arith.mulf %182, %184 : vector<2x12xf32>
    %188 = arith.addf %186, %187 : vector<2x12xf32>
    %189 = math.tanh %188 : vector<2x12xf32>
    %190 = arith.mulf %185, %189 : vector<2x12xf32>
    %c14 = arith.constant 14 : index
    %c0_23 = arith.constant 0 : index
    %191 = vector.load %arg1[%c14, %c0_23] : memref<56x48xf32, #tpu.memory_space<vmem>>, vector<1x48xf32>
    %c15 = arith.constant 15 : index
    %c0_24 = arith.constant 0 : index
    %192 = vector.load %arg1[%c15, %c0_24] : memref<56x48xf32, #tpu.memory_space<vmem>>, vector<1x48xf32>
    %193 = vector.extract_strided_slice %3 {offsets = [0, 7], sizes = [2, 1], strides = [1, 1]} : vector<2x8xf32> to vector<2x1xf32>
    %194 = vector.broadcast %193 : vector<2x1xf32> to vector<2x48xf32>
    %195 = vector.broadcast %191 : vector<1x48xf32> to vector<2x48xf32>
    %196 = arith.mulf %194, %195 : vector<2x48xf32>
    %197 = vector.broadcast %192 : vector<1x48xf32> to vector<2x48xf32>
    %198 = arith.addf %196, %197 : vector<2x48xf32>
    %199 = arith.negf %198 : vector<2x48xf32>
    %200 = math.exp %199 : vector<2x48xf32>
    %cst_25 = arith.constant 1.000000e+00 : f32
    %201 = vector.broadcast %cst_25 : f32 to vector<2x48xf32>
    %202 = arith.addf %201, %200 : vector<2x48xf32>
    %203 = arith.divf %201, %202 : vector<2x48xf32>
    %204 = vector.extract_strided_slice %203 {offsets = [0, 0], sizes = [2, 12], strides = [1, 1]} : vector<2x48xf32> to vector<2x12xf32>
    %205 = vector.extract_strided_slice %198 {offsets = [0, 24], sizes = [2, 12], strides = [1, 1]} : vector<2x48xf32> to vector<2x12xf32>
    %206 = math.tanh %205 : vector<2x12xf32>
    %207 = arith.mulf %204, %206 : vector<2x12xf32>
    %208 = vector.extract_strided_slice %203 {offsets = [0, 36], sizes = [2, 12], strides = [1, 1]} : vector<2x48xf32> to vector<2x12xf32>
    %209 = math.tanh %207 : vector<2x12xf32>
    %210 = arith.mulf %208, %209 : vector<2x12xf32>
    %c16 = arith.constant 16 : index
    %c0_26 = arith.constant 0 : index
    %211 = vector.load %arg1[%c16, %c0_26] : memref<56x48xf32, #tpu.memory_space<vmem>>, vector<24x12xf32>
    %c40 = arith.constant 40 : index
    %c0_27 = arith.constant 0 : index
    %212 = vector.load %arg1[%c40, %c0_27] : memref<56x48xf32, #tpu.memory_space<vmem>>, vector<12x24xf32>
    %c52 = arith.constant 52 : index
    %c0_28 = arith.constant 0 : index
    %213 = vector.load %arg1[%c52, %c0_28] : memref<56x48xf32, #tpu.memory_space<vmem>>, vector<1x12xf32>
    %c53 = arith.constant 53 : index
    %c0_29 = arith.constant 0 : index
    %214 = vector.load %arg1[%c53, %c0_29] : memref<56x48xf32, #tpu.memory_space<vmem>>, vector<1x24xf32>
    %215 = tpu.concatenate %190, %210 in 1 : vector<2x12xf32>, vector<2x12xf32> -> vector<2x24xf32>
    %cst_30 = arith.constant dense<0.000000e+00> : vector<2x12xf32>
    %216 = tpu.matmul %215, %211, %cst_30 {dimension_numbers = #tpu.dot_dimension_numbers<[1], [0], [0], [1], [0, 0, 1, 1], [], []>} : vector<2x24xf32>, vector<24x12xf32>, vector<2x12xf32> -> vector<2x12xf32>
    %217 = vector.broadcast %213 : vector<1x12xf32> to vector<2x12xf32>
    %218 = arith.addf %216, %217 : vector<2x12xf32>
    %cst_31 = arith.constant 0.000000e+00 : f32
    %219 = vector.broadcast %cst_31 : f32 to vector<2x12xf32>
    %220 = arith.maximumf %218, %219 : vector<2x12xf32>
    %cst_32 = arith.constant dense<0.000000e+00> : vector<2x24xf32>
    %221 = tpu.matmul %220, %212, %cst_32 {dimension_numbers = #tpu.dot_dimension_numbers<[1], [0], [0], [1], [0, 0, 1, 1], [], []>} : vector<2x12xf32>, vector<12x24xf32>, vector<2x24xf32> -> vector<2x24xf32>
    %222 = vector.broadcast %214 : vector<1x24xf32> to vector<2x24xf32>
    %223 = arith.addf %221, %222 : vector<2x24xf32>
    %224 = vector.extract_strided_slice %223 {offsets = [0, 0], sizes = [2, 12], strides = [1, 1]} : vector<2x24xf32> to vector<2x12xf32>
    %225 = vector.extract_strided_slice %223 {offsets = [0, 12], sizes = [2, 12], strides = [1, 1]} : vector<2x24xf32> to vector<2x12xf32>
    %cst_33 = arith.constant 5.000000e-01 : f32
    %226 = vector.broadcast %cst_33 : f32 to vector<2x12xf32>
    %227 = arith.mulf %226, %225 : vector<2x12xf32>
    %228 = math.exp %227 : vector<2x12xf32>
    %229 = arith.mulf %4, %228 : vector<2x12xf32>
    %230 = arith.addf %229, %224 : vector<2x12xf32>
    %231 = tpu.concatenate %230, %224, %225 in 1 : vector<2x12xf32>, vector<2x12xf32>, vector<2x12xf32> -> vector<2x36xf32>
    %c0_34 = arith.constant 0 : index
    %c0_35 = arith.constant 0 : index
    %232 = vector.load %arg2[%c0_34, %c0_35] : memref<2x36xf32, #tpu.memory_space<vmem>>, vector<2x36xf32>
    tpu.vector_store %arg2[%c0_34, %c0_35], %231 {strides = array<i32>} : memref<2x36xf32, #tpu.memory_space<vmem>>, vector<2x36xf32>,
    return
  }
}

</mosaic_0001>

<llo_original>
// kernel: encoder_forward.1
$region0: #{encoder_forward.1}
  #allocation0 [shape = 'u32[]', space=smem, size = 0x4, offset = 0x4, fixed_abs, tag = 'smem constant byte address 0x4 - core index']
  #allocation1 [shape = 'u32[144,128]{1,0:T(1,128)}', space=vmem, size = 0x12000, scoped, tag = 'internal scratch']
  %s0 = inlined_call_operand.vmem [shape: f32[2,20], index: 0, kind: input, shape index: {}]
  %s1 = inlined_call_operand.vmem [shape: f32[56,48], index: 1, kind: input, shape index: {}]
  %s2 = inlined_call_operand.vmem [shape: f32[2,36], index: 2, kind: output, shape index: {}]
  %s3 = sld [smem:[#allocation0]]
  $region18: #{encoder_forward.1} parent=0
    _
  %s5 = ssub.s32 1, %s3
  %s6 = scalar_select 0, %s5, %s3
  // Predicated region
  $region2: #{encoder_forward.1} parent=0 // pred_check
    _
  $region3: #{encoder_forward.1} parent=0 // pred_check_branch
    %8 = sbr.rel (0) target = $region5
  $region4: #{encoder_forward.1} parent=0 // pred_region
    _
  $region5: #{encoder_forward.1} parent=0 // pred_fallthru
    _
  // Predicated region
  $region6: #{encoder_forward.1} parent=0 // pred_check
    _
  $region7: #{encoder_forward.1} parent=0 // pred_check_branch
    %10 = sbr.rel (0) target = $region9
  $region8: #{encoder_forward.1} parent=0 // pred_region
    _
  $region9: #{encoder_forward.1} parent=0 // pred_fallthru
    _
  %v11 = vld [vmem:[%s1] sm:$0xff]
  %v12 = vld [vmem:[%s1 + $0x8] sm:$0xf]
  %v13 = vld [vmem:[%s1 + $0xc] sm:$0x1]
  %v14 = vld [vmem:[%s1 + $0xd] sm:$0x1]
  %v15 = vld [vmem:[%s0] sm:$0x3]
  %17 = vset.pattern.permute.xlu0 0
  %18 = vperm.xlu0 %17, %v15
  %v19 = vpop.permute.xlu0 %18
  %v21 = vlaneseq
  %v22 = vshrl.u32 %v21, 7
  %v23 = vsub.s32 0, %v22
  %v24 = vrot.slane %v13, %v23
  %v25 = vmul.f32 %v19, %v24
  %v26 = vlaneseq
  %v27 = vshrl.u32 %v26, 7
  %v28 = vsub.s32 0, %v27
  %v29 = vrot.slane %v14, %v28
  %v30 = vadd.f32 %v25, %v29
  %31 = vset.pattern.permute.xlu0 1
  %32 = vperm.xlu0 %31, %v15
  %v33 = vpop.permute.xlu0 %32
  %v35 = vmul.f32 %v33, %v24
  %v36 = vadd.f32 %v35, %v29
  %37 = vset.pattern.permute.xlu0 2
  %38 = vperm.xlu0 %37, %v15
  %v39 = vpop.permute.xlu0 %38
  %v41 = vmul.f32 %v39, %v24
  %v42 = vadd.f32 %v41, %v29
  %43 = vset.pattern.permute.xlu0 3
  %44 = vperm.xlu0 %43, %v15
  %v45 = vpop.permute.xlu0 %44
  %v47 = vmul.f32 %v45, %v24
  %v48 = vadd.f32 %v47, %v29
  %49 = vset.pattern.permute.xlu0 4
  %50 = vperm.xlu0 %49, %v15
  %v51 = vpop.permute.xlu0 %50
  %v53 = vmul.f32 %v51, %v24
  %v54 = vadd.f32 %v53, %v29
  %55 = vset.pattern.permute.xlu0 5
  %56 = vperm.xlu0 %55, %v15
  %v57 = vpop.permute.xlu0 %56
  %v59 = vmul.f32 %v57, %v24
  %v60 = vadd.f32 %v59, %v29
  %61 = vset.pattern.permute.xlu0 6
  %62 = vperm.xlu0 %61, %v15
  %v63 = vpop.permute.xlu0 %62
  %v65 = vmul.f32 %v63, %v24
  %v66 = vadd.f32 %v65, %v29
  %67 = vset.pattern.permute.xlu0 7
  %68 = vperm.xlu0 %67, %v15
  %v69 = vpop.permute.xlu0 %68
  %v71 = vmul.f32 %v69, %v24
  %v72 = vadd.f32 %v71, %v29
  %vm73 = vcmask 97280
  %v75 = vsel %vm73, 0.0, 0
  %vm77 = vcmask 1043456
  %v79 = vsel %vm77, %v12, 0
  %81 = vmatprep.subr.mxu0 0.0
  %82 = vmatpush1.msra.mxu0 %v11
  %83 = vmatprep.subr.mxu0 0.0
  %84 = vmatpush1.msra.mxu0 %v79
  %85 = vmatprep.subr.mxu0 0.0
  %86 = vmatpush1.msra.mxu0 0.0
  %87 = vmatprep.subr.mxu0 0.0
  %88 = vmatpush1.msra.mxu0 0.0
  %89 = vmatprep.subr.mxu0 0.0
  %90 = vmatpush1.msra.mxu0 0.0
  %91 = vmatprep.subr.mxu0 0.0
  %92 = vmatpush1.msra.mxu0 0.0
  %93 = vmatprep.subr.mxu0 0.0
  %94 = vmatpush1.msra.mxu0 0.0
  %95 = vmatprep.subr.mxu0 0.0
  %96 = vmatpush1.msra.mxu0 0.0
  %97 = vmatprep.subr.mxu0 0.0
  %98 = vmatpush1.msra.mxu0 0.0
  %99 = vmatprep.subr.mxu0 0.0
  %100 = vmatpush1.msra.mxu0 0.0
  %101 = vmatprep.subr.mxu0 0.0
  %102 = vmatpush1.msra.mxu0 0.0
  %103 = vmatprep.subr.mxu0 0.0
  %104 = vmatpush1.msra.mxu0 0.0
  %105 = vmatprep.subr.mxu0 0.0
  %106 = vmatpush1.msra.mxu0 0.0
  %107 = vmatprep.subr.mxu0 0.0
  %108 = vmatpush1.msra.mxu0 0.0
  %109 = vmatprep.subr.mxu0 0.0
  %110 = vmatpush1.msra.mxu0 0.0
  %111 = vmatprep.subr.mxu0 0.0
  %112 = vmatpush1.msra.mxu0 0.0
  %113 = vmatprep.subr.mxu0 0.0
  %114 = vmatpush1.msra.mxu0 0.0
  %115 = vmatprep.subr.mxu0 0.0
  %116 = vmatpush1.msra.mxu0 0.0
  %117 = vmatprep.subr.mxu0 0.0
  %118 = vmatpush1.msra.mxu0 0.0
  %119 = vmatprep.subr.mxu0 0.0
  %120 = vmatpush1.msra.mxu0 0.0
  %121 = vmatprep.subr.mxu0 0.0
  %122 = vmatpush1.msra.mxu0 0.0
  %123 = vmatprep.subr.mxu0 0.0
  %124 = vmatpush1.msra.mxu0 0.0
  %125 = vmatprep.subr.mxu0 0.0
  %126 = vmatpush1.msra.mxu0 0.0
  %127 = vmatprep.subr.mxu0 0.0
  %128 = vmatpush1.msra.mxu0 0.0
  %129 = vmatprep.subr.mxu0 0.0
  %130 = vmatpush1.msra.mxu0 0.0
  %131 = vmatprep.subr.mxu0 0.0
  %132 = vmatpush1.msra.mxu0 0.0
  %133 = vmatprep.subr.mxu0 0.0
  %134 = vmatpush1.msra.mxu0 0.0
  %135 = vmatprep.subr.mxu0 0.0
  %136 = vmatpush1.msra.mxu0 0.0
  %137 = vmatprep.subr.mxu0 0.0
  %138 = vmatpush1.msra.mxu0 0.0
  %139 = vmatprep.subr.mxu0 0.0
  %140 = vmatpush1.msra.mxu0 0.0
  %141 = vmatprep.subr.mxu0 0.0
  %142 = vmatpush1.msra.mxu0 0.0
  %143 = vmatprep.subr.mxu0 0.0
  %144 = vmatpush1.msra.mxu0 0.0
  %145 = vmatprep.mubr.f32.mxu0 0.0
  %146 = vmatmul.mubr.f32.gmra.mrb[0].mxu0 %v75
  %v147 = vpop.f32.mrb[0].mxu0
  %v148 = vadd.f32 0.0, %v147
  %v149 = vpop.f32.mrb[0].mxu0
  %150 = vdwg.mxu0
  %v151 = vadd.f32 %v30, %v148
  %v152 = vxor.u32 %v151, 2147483648
  %v153 = vmul.f32 %v152, 1.442695
  %v154 = vpow.pop %v153
  %v155 = vadd.f32 %v154, 1.0
  %v156 = vrcp.pop %v155
  %v157 = vmul.f32 1.0, %v156
  %v158 = vtanh.pop %v151
  %v159 = vmul.f32 %v157, 0.0
  %161 = vrot.lane.b32.xlu0 %v158, 104
  %v162 = vpop.permute.xlu0 %161
  %v164 = vmul.f32 %v157, %v162
  %166 = vrot.lane.b32.xlu0 %v164, 12
  %v167 = vpop.permute.xlu0 %166
  %v169 = vadd.f32 %v159, %v167
  %v170 = vtanh.pop %v169
  %172 = vrot.lane.b32.xlu0 %v170, 24
  %v173 = vpop.permute.xlu0 %172
  %v175 = vmul.f32 %v157, %v173
  %177 = vrot.lane.b32.xlu0 %v175, 92
  %v178 = vpop.permute.xlu0 %177
  %v179 = vsel %vm73, %v178, 0
  %181 = vmatprep.subr.mxu0 0.0
  %182 = vmatpush1.msra.mxu0 %v11
  %183 = vmatprep.subr.mxu0 0.0
  %184 = vmatpush1.msra.mxu0 %v79
  %185 = vmatprep.subr.mxu0 0.0
  %186 = vmatpush1.msra.mxu0 0.0
  %187 = vmatprep.subr.mxu0 0.0
  %188 = vmatpush1.msra.mxu0 0.0
  %189 = vmatprep.subr.mxu0 0.0
  %190 = vmatpush1.msra.mxu0 0.0
  %191 = vmatprep.subr.mxu0 0.0
  %192 = vmatpush1.msra.mxu0 0.0
  %193 = vmatprep.subr.mxu0 0.0
  %194 = vmatpush1.msra.mxu0 0.0
  %195 = vmatprep.subr.mxu0 0.0
  %196 = vmatpush1.msra.mxu0 0.0
  %197 = vmatprep.subr.mxu0 0.0
  %198 = vmatpush1.msra.mxu0 0.0
  %199 = vmatprep.subr.mxu0 0.0
  %200 = vmatpush1.msra.mxu0 0.0
  %201 = vmatprep.subr.mxu0 0.0
  %202 = vmatpush1.msra.mxu0 0.0
  %203 = vmatprep.subr.mxu0 0.0
  %204 = vmatpush1.msra.mxu0 0.0
  %205 = vmatprep.subr.mxu0 0.0
  %206 = vmatpush1.msra.mxu0 0.0
  %207 = vmatprep.subr.mxu0 0.0
  %208 = vmatpush1.msra.mxu0 0.0
  %209 = vmatprep.subr.mxu0 0.0
  %210 = vmatpush1.msra.mxu0 0.0
  %211 = vmatprep.subr.mxu0 0.0
  %212 = vmatpush1.msra.mxu0 0.0
  %213 = vmatprep.subr.mxu0 0.0
  %214 = vmatpush1.msra.mxu0 0.0
  %215 = vmatprep.subr.mxu0 0.0
  %216 = vmatpush1.msra.mxu0 0.0
  %217 = vmatprep.subr.mxu0 0.0
  %218 = vmatpush1.msra.mxu0 0.0
  %219 = vmatprep.subr.mxu0 0.0
  %220 = vmatpush1.msra.mxu0 0.0
  %221 = vmatprep.subr.mxu0 0.0
  %222 = vmatpush1.msra.mxu0 0.0
  %223 = vmatprep.subr.mxu0 0.0
  %224 = vmatpush1.msra.mxu0 0.0
  %225 = vmatprep.subr.mxu0 0.0
  %226 = vmatpush1.msra.mxu0 0.0
  %227 = vmatprep.subr.mxu0 0.0
  %228 = vmatpush1.msra.mxu0 0.0
  %229 = vmatprep.subr.mxu0 0.0
  %230 = vmatpush1.msra.mxu0 0.0
  %231 = vmatprep.subr.mxu0 0.0
  %232 = vmatpush1.msra.mxu0 0.0
  %233 = vmatprep.subr.mxu0 0.0
  %234 = vmatpush1.msra.mxu0 0.0
  %235 = vmatprep.subr.mxu0 0.0
  %236 = vmatpush1.msra.mxu0 0.0
  %237 = vmatprep.subr.mxu0 0.0
  %238 = vmatpush1.msra.mxu0 0.0
  %239 = vmatprep.subr.mxu0 0.0
  %240 = vmatpush1.msra.mxu0 0.0
  %241 = vmatprep.subr.mxu0 0.0
  %242 = vmatpush1.msra.mxu0 0.0
  %243 = vmatprep.subr.mxu0 0.0
  %244 = vmatpush1.msra.mxu0 0.0
  %245 = vmatprep.mubr.f32.mxu0 0.0
  %246 = vmatmul.mubr.f32.gmra.mrb[0].mxu0 %v179
  %v247 = vpop.f32.mrb[0].mxu0
  %v248 = vadd.f32 0.0, %v247
  %v249 = vpop.f32.mrb[0].mxu0
  %250 = vdwg.mxu0
  %v251 = vadd.f32 %v36, %v248
  %v252 = vxor.u32 %v251, 2147483648
  %v253 = vmul.f32 %v252, 1.442695
  %v254 = vpow.pop %v253
  %v255 = vadd.f32 %v254, 1.0
  %v256 = vrcp.pop %v255
  %v257 = vmul.f32 1.0, %v256
  %v258 = vtanh.pop %v251
  %v259 = vmul.f32 %v257, %v169
  %261 = vrot.lane.b32.xlu0 %v258, 104
  %v262 = vpop.permute.xlu0 %261
  %v264 = vmul.f32 %v257, %v262
  %266 = vrot.lane.b32.xlu0 %v264, 12
  %v267 = vpop.permute.xlu0 %266
  %v269 = vadd.f32 %v259, %v267
  %v270 = vtanh.pop %v269
  %272 = vrot.lane.b32.xlu0 %v270, 24
  %v273 = vpop.permute.xlu0 %272
  %v275 = vmul.f32 %v257, %v273
  %277 = vrot.lane.b32.xlu0 %v275, 92
  %v278 = vpop.permute.xlu0 %277
  %v279 = vsel %vm73, %v278, 0
  %281 = vmatprep.subr.mxu0 0.0
  %282 = vmatpush1.msra.mxu0 %v11
  %283 = vmatprep.subr.mxu0 0.0
  %284 = vmatpush1.msra.mxu0 %v79
  %285 = vmatprep.subr.mxu0 0.0
  %286 = vmatpush1.msra.mxu0 0.0
  %287 = vmatprep.subr.mxu0 0.0
  %288 = vmatpush1.msra.mxu0 0.0
  %289 = vmatprep.subr.mxu0 0.0
  %290 = vmatpush1.msra.mxu0 0.0
  %291 = vmatprep.subr.mxu0 0.0
  %292 = vmatpush1.msra.mxu0 0.0
  %293 = vmatprep.subr.mxu0 0.0
  %294 = vmatpush1.msra.mxu0 0.0
  %295 = vmatprep.subr.mxu0 0.0
  %296 = vmatpush1.msra.mxu0 0.0
  %297 = vmatprep.subr.mxu0 0.0
  %298 = vmatpush1.msra.mxu0 0.0
  %299 = vmatprep.subr.mxu0 0.0
  %300 = vmatpush1.msra.mxu0 0.0
  %301 = vmatprep.subr.mxu0 0.0
  %302 = vmatpush1.msra.mxu0 0.0
  %303 = vmatprep.subr.mxu0 0.0
  %304 = vmatpush1.msra.mxu0 0.0
  %305 = vmatprep.subr.mxu0 0.0
  %306 = vmatpush1.msra.mxu0 0.0
  %307 = vmatprep.subr.mxu0 0.0
  %308 = vmatpush1.msra.mxu0 0.0
  %309 = vmatprep.subr.mxu0 0.0
  %310 = vmatpush1.msra.mxu0 0.0
  %311 = vmatprep.subr.mxu0 0.0
  %312 = vmatpush1.msra.mxu0 0.0
  %313 = vmatprep.subr.mxu0 0.0
  %314 = vmatpush1.msra.mxu0 0.0
  %315 = vmatprep.subr.mxu0 0.0
  %316 = vmatpush1.msra.mxu0 0.0
  %317 = vmatprep.subr.mxu0 0.0
  %318 = vmatpush1.msra.mxu0 0.0
  %319 = vmatprep.subr.mxu0 0.0
  %320 = vmatpush1.msra.mxu0 0.0
  %321 = vmatprep.subr.mxu0 0.0
  %322 = vmatpush1.msra.mxu0 0.0
  %323 = vmatprep.subr.mxu0 0.0
  %324 = vmatpush1.msra.mxu0 0.0
  %325 = vmatprep.subr.mxu0 0.0
  %326 = vmatpush1.msra.mxu0 0.0
  %327 = vmatprep.subr.mxu0 0.0
  %328 = vmatpush1.msra.mxu0 0.0
  %329 = vmatprep.subr.mxu0 0.0
  %330 = vmatpush1.msra.mxu0 0.0
  %331 = vmatprep.subr.mxu0 0.0
  %332 = vmatpush1.msra.mxu0 0.0
  %333 = vmatprep.subr.mxu0 0.0
  %334 = vmatpush1.msra.mxu0 0.0
  %335 = vmatprep.subr.mxu0 0.0
  %336 = vmatpush1.msra.mxu0 0.0
  %337 = vmatprep.subr.mxu0 0.0
  %338 = vmatpush1.msra.mxu0 0.0
  %339 = vmatprep.subr.mxu0 0.0
  %340 = vmatpush1.msra.mxu0 0.0
  %341 = vmatprep.subr.mxu0 0.0
  %342 = vmatpush1.msra.mxu0 0.0
  %343 = vmatprep.subr.mxu0 0.0
  %344 = vmatpush1.msra.mxu0 0.0
  %345 = vmatprep.mubr.f32.mxu0 0.0
  %346 = vmatmul.mubr.f32.gmra.mrb[0].mxu0 %v279
  %v347 = vpop.f32.mrb[0].mxu0
  %v348 = vadd.f32 0.0, %v347
  %v349 = vpop.f32.mrb[0].mxu0
  %350 = vdwg.mxu0
  %v351 = vadd.f32 %v42, %v348
  %v352 = vxor.u32 %v351, 2147483648
  %v353 = vmul.f32 %v352, 1.442695
  %v354 = vpow.pop %v353
  %v355 = vadd.f32 %v354, 1.0
  %v356 = vrcp.pop %v355
  %v357 = vmul.f32 1.0, %v356
  %v358 = vtanh.pop %v351
  %v359 = vmul.f32 %v357, %v269
  %361 = vrot.lane.b32.xlu0 %v358, 104
  %v362 = vpop.permute.xlu0 %361
  %v364 = vmul.f32 %v357, %v362
  %366 = vrot.lane.b32.xlu0 %v364, 12
  %v367 = vpop.permute.xlu0 %366
  %v369 = vadd.f32 %v359, %v367
  %v370 = vtanh.pop %v369
  %372 = vrot.lane.b32.xlu0 %v370, 24
  %v373 = vpop.permute.xlu0 %372
  %v375 = vmul.f32 %v357, %v373
  %377 = vrot.lane.b32.xlu0 %v375, 92
  %v378 = vpop.permute.xlu0 %377
  %v379 = vsel %vm73, %v378, 0
  %381 = vmatprep.subr.mxu0 0.0
  %382 = vmatpush1.msra.mxu0 %v11
  %383 = vmatprep.subr.mxu0 0.0
  %384 = vmatpush1.msra.mxu0 %v79
  %385 = vmatprep.subr.mxu0 0.0
  %386 = vmatpush1.msra.mxu0 0.0
  %387 = vmatprep.subr.mxu0 0.0
  %388 = vmatpush1.msra.mxu0 0.0
  %389 = vmatprep.subr.mxu0 0.0
  %390 = vmatpush1.msra.mxu0 0.0
  %391 = vmatprep.subr.mxu0 0.0
  %392 = vmatpush1.msra.mxu0 0.0
  %393 = vmatprep.subr.mxu0 0.0
  %394 = vmatpush1.msra.mxu0 0.0
  %395 = vmatprep.subr.mxu0 0.0
  %396 = vmatpush1.msra.mxu0 0.0
  %397 = vmatprep.subr.mxu0 0.0
  %398 = vmatpush1.msra.mxu0 0.0
  %399 = vmatprep.subr.mxu0 0.0
  %400 = vmatpush1.msra.mxu0 0.0
  %401 = vmatprep.subr.mxu0 0.0
  %402 = vmatpush1.msra.mxu0 0.0
  %403 = vmatprep.subr.mxu0 0.0
  %404 = vmatpush1.msra.mxu0 0.0
  %405 = vmatprep.subr.mxu0 0.0
  %406 = vmatpush1.msra.mxu0 0.0
  %407 = vmatprep.subr.mxu0 0.0
  %408 = vmatpush1.msra.mxu0 0.0
  %409 = vmatprep.subr.mxu0 0.0
  %410 = vmatpush1.msra.mxu0 0.0
  %411 = vmatprep.subr.mxu0 0.0
  %412 = vmatpush1.msra.mxu0 0.0
  %413 = vmatprep.subr.mxu0 0.0
  %414 = vmatpush1.msra.mxu0 0.0
  %415 = vmatprep.subr.mxu0 0.0
  %416 = vmatpush1.msra.mxu0 0.0
  %417 = vmatprep.subr.mxu0 0.0
  %418 = vmatpush1.msra.mxu0 0.0
  %419 = vmatprep.subr.mxu0 0.0
  %420 = vmatpush1.msra.mxu0 0.0
  %421 = vmatprep.subr.mxu0 0.0
  %422 = vmatpush1.msra.mxu0 0.0
  %423 = vmatprep.subr.mxu0 0.0
  %424 = vmatpush1.msra.mxu0 0.0
  %425 = vmatprep.subr.mxu0 0.0
  %426 = vmatpush1.msra.mxu0 0.0
  %427 = vmatprep.subr.mxu0 0.0
  %428 = vmatpush1.msra.mxu0 0.0
  %429 = vmatprep.subr.mxu0 0.0
  %430 = vmatpush1.msra.mxu0 0.0
  %431 = vmatprep.subr.mxu0 0.0
  %432 = vmatpush1.msra.mxu0 0.0
  %433 = vmatprep.subr.mxu0 0.0
  %434 = vmatpush1.msra.mxu0 0.0
  %435 = vmatprep.subr.mxu0 0.0
  %436 = vmatpush1.msra.mxu0 0.0
  %437 = vmatprep.subr.mxu0 0.0
  %438 = vmatpush1.msra.mxu0 0.0
  %439 = vmatprep.subr.mxu0 0.0
  %440 = vmatpush1.msra.mxu0 0.0
  %441 = vmatprep.subr.mxu0 0.0
  %442 = vmatpush1.msra.mxu0 0.0
  %443 = vmatprep.subr.mxu0 0.0
  %444 = vmatpush1.msra.mxu0 0.0
  %445 = vmatprep.mubr.f32.mxu0 0.0
  %446 = vmatmul.mubr.f32.gmra.mrb[0].mxu0 %v379
  %v447 = vpop.f32.mrb[0].mxu0
  %v448 = vadd.f32 0.0, %v447
  %v449 = vpop.f32.mrb[0].mxu0
  %450 = vdwg.mxu0
  %v451 = vadd.f32 %v48, %v448
  %v452 = vxor.u32 %v451, 2147483648
  %v453 = vmul.f32 %v452, 1.442695
  %v454 = vpow.pop %v453
  %v455 = vadd.f32 %v454, 1.0
  %v456 = vrcp.pop %v455
  %v457 = vmul.f32 1.0, %v456
  %v458 = vtanh.pop %v451
  %v459 = vmul.f32 %v457, %v369
  %461 = vrot.lane.b32.xlu0 %v458, 104
  %v462 = vpop.permute.xlu0 %461
  %v464 = vmul.f32 %v457, %v462
  %466 = vrot.lane.b32.xlu0 %v464, 12
  %v467 = vpop.permute.xlu0 %466
  %v469 = vadd.f32 %v459, %v467
  %v470 = vtanh.pop %v469
  %472 = vrot.lane.b32.xlu0 %v470, 24
  %v473 = vpop.permute.xlu0 %472
  %v475 = vmul.f32 %v457, %v473
  %477 = vrot.lane.b32.xlu0 %v475, 92
  %v478 = vpop.permute.xlu0 %477
  %v479 = vsel %vm73, %v478, 0
  %481 = vmatprep.subr.mxu0 0.0
  %482 = vmatpush1.msra.mxu0 %v11
  %483 = vmatprep.subr.mxu0 0.0
  %484 = vmatpush1.msra.mxu0 %v79
  %485 = vmatprep.subr.mxu0 0.0
  %486 = vmatpush1.msra.mxu0 0.0
  %487 = vmatprep.subr.mxu0 0.0
  %488 = vmatpush1.msra.mxu0 0.0
  %489 = vmatprep.subr.mxu0 0.0
  %490 = vmatpush1.msra.mxu0 0.0
  %491 = vmatprep.subr.mxu0 0.0
  %492 = vmatpush1.msra.mxu0 0.0
  %493 = vmatprep.subr.mxu0 0.0
  %494 = vmatpush1.msra.mxu0 0.0
  %495 = vmatprep.subr.mxu0 0.0
  %496 = vmatpush1.msra.mxu0 0.0
  %497 = vmatprep.subr.mxu0 0.0
  %498 = vmatpush1.msra.mxu0 0.0
  %499 = vmatprep.subr.mxu0 0.0
  %500 = vmatpush1.msra.mxu0 0.0
  %501 = vmatprep.subr.mxu0 0.0
  %502 = vmatpush1.msra.mxu0 0.0
  %503 = vmatprep.subr.mxu0 0.0
  %504 = vmatpush1.msra.mxu0 0.0
  %505 = vmatprep.subr.mxu0 0.0
  %506 = vmatpush1.msra.mxu0 0.0
  %507 = vmatprep.subr.mxu0 0.0
  %508 = vmatpush1.msra.mxu0 0.0
  %509 = vmatprep.subr.mxu0 0.0
  %510 = vmatpush1.msra.mxu0 0.0
  %511 = vmatprep.subr.mxu0 0.0
  %512 = vmatpush1.msra.mxu0 0.0
  %513 = vmatprep.subr.mxu0 0.0
  %514 = vmatpush1.msra.mxu0 0.0
  %515 = vmatprep.subr.mxu0 0.0
  %516 = vmatpush1.msra.mxu0 0.0
  %517 = vmatprep.subr.mxu0 0.0
  %518 = vmatpush1.msra.mxu0 0.0
  %519 = vmatprep.subr.mxu0 0.0
  %520 = vmatpush1.msra.mxu0 0.0
  %521 = vmatprep.subr.mxu0 0.0
  %522 = vmatpush1.msra.mxu0 0.0
  %523 = vmatprep.subr.mxu0 0.0
  %524 = vmatpush1.msra.mxu0 0.0
  %525 = vmatprep.subr.mxu0 0.0
  %526 = vmatpush1.msra.mxu0 0.0
  %527 = vmatprep.subr.mxu0 0.0
  %528 = vmatpush1.msra.mxu0 0.0
  %529 = vmatprep.subr.mxu0 0.0
  %530 = vmatpush1.msra.mxu0 0.0
  %531 = vmatprep.subr.mxu0 0.0
  %532 = vmatpush1.msra.mxu0 0.0
  %533 = vmatprep.subr.mxu0 0.0
  %534 = vmatpush1.msra.mxu0 0.0
  %535 = vmatprep.subr.mxu0 0.0
  %536 = vmatpush1.msra.mxu0 0.0
  %537 = vmatprep.subr.mxu0 0.0
  %538 = vmatpush1.msra.mxu0 0.0
  %539 = vmatprep.subr.mxu0 0.0
  %540 = vmatpush1.msra.mxu0 0.0
  %541 = vmatprep.subr.mxu0 0.0
  %542 = vmatpush1.msra.mxu0 0.0
  %543 = vmatprep.subr.mxu0 0.0
  %544 = vmatpush1.msra.mxu0 0.0
  %545 = vmatprep.mubr.f32.mxu0 0.0
  %546 = vmatmul.mubr.f32.gmra.mrb[0].mxu0 %v479
  %v547 = vpop.f32.mrb[0].mxu0
  %v548 = vadd.f32 0.0, %v547
  %v549 = vpop.f32.mrb[0].mxu0
  %550 = vdwg.mxu0
  %v551 = vadd.f32 %v54, %v548
  %v552 = vxor.u32 %v551, 2147483648
  %v553 = vmul.f32 %v552, 1.442695
  %v554 = vpow.pop %v553
  %v555 = vadd.f32 %v554, 1.0
  %v556 = vrcp.pop %v555
  %v557 = vmul.f32 1.0, %v556
  %v558 = vtanh.pop %v551
  %v559 = vmul.f32 %v557, %v469
  %561 = vrot.lane.b32.xlu0 %v558, 104
  %v562 = vpop.permute.xlu0 %561
  %v564 = vmul.f32 %v557, %v562
  %566 = vrot.lane.b32.xlu0 %v564, 12
  %v567 = vpop.permute.xlu0 %566
  %v569 = vadd.f32 %v559, %v567
  %v570 = vtanh.pop %v569
  %572 = vrot.lane.b32.xlu0 %v570, 24
  %v573 = vpop.permute.xlu0 %572
  %v575 = vmul.f32 %v557, %v573
  %577 = vrot.lane.b32.xlu0 %v575, 92
  %v578 = vpop.permute.xlu0 %577
  %v579 = vsel %vm73, %v578, 0
  %581 = vmatprep.subr.mxu0 0.0
  %582 = vmatpush1.msra.mxu0 %v11
  %583 = vmatprep.subr.mxu0 0.0
  %584 = vmatpush1.msra.mxu0 %v79
  %585 = vmatprep.subr.mxu0 0.0
  %586 = vmatpush1.msra.mxu0 0.0
  %587 = vmatprep.subr.mxu0 0.0
  %588 = vmatpush1.msra.mxu0 0.0
  %589 = vmatprep.subr.mxu0 0.0
  %590 = vmatpush1.msra.mxu0 0.0
  %591 = vmatprep.subr.mxu0 0.0
  %592 = vmatpush1.msra.mxu0 0.0
  %593 = vmatprep.subr.mxu0 0.0
  %594 = vmatpush1.msra.mxu0 0.0
  %595 = vmatprep.subr.mxu0 0.0
  %596 = vmatpush1.msra.mxu0 0.0
  %597 = vmatprep.subr.mxu0 0.0
  %598 = vmatpush1.msra.mxu0 0.0
  %599 = vmatprep.subr.mxu0 0.0
  %600 = vmatpush1.msra.mxu0 0.0
  %601 = vmatprep.subr.mxu0 0.0
  %602 = vmatpush1.msra.mxu0 0.0
  %603 = vmatprep.subr.mxu0 0.0
  %604 = vmatpush1.msra.mxu0 0.0
  %605 = vmatprep.subr.mxu0 0.0
  %606 = vmatpush1.msra.mxu0 0.0
  %607 = vmatprep.subr.mxu0 0.0
  %608 = vmatpush1.msra.mxu0 0.0
  %609 = vmatprep.subr.mxu0 0.0
  %610 = vmatpush1.msra.mxu0 0.0
  %611 = vmatprep.subr.mxu0 0.0
  %612 = vmatpush1.msra.mxu0 0.0
  %613 = vmatprep.subr.mxu0 0.0
  %614 = vmatpush1.msra.mxu0 0.0
  %615 = vmatprep.subr.mxu0 0.0
  %616 = vmatpush1.msra.mxu0 0.0
  %617 = vmatprep.subr.mxu0 0.0
  %618 = vmatpush1.msra.mxu0 0.0
  %619 = vmatprep.subr.mxu0 0.0
  %620 = vmatpush1.msra.mxu0 0.0
  %621 = vmatprep.subr.mxu0 0.0
  %622 = vmatpush1.msra.mxu0 0.0
  %623 = vmatprep.subr.mxu0 0.0
  %624 = vmatpush1.msra.mxu0 0.0
  %625 = vmatprep.subr.mxu0 0.0
  %626 = vmatpush1.msra.mxu0 0.0
  %627 = vmatprep.subr.mxu0 0.0
  %628 = vmatpush1.msra.mxu0 0.0
  %629 = vmatprep.subr.mxu0 0.0
  %630 = vmatpush1.msra.mxu0 0.0
  %631 = vmatprep.subr.mxu0 0.0
  %632 = vmatpush1.msra.mxu0 0.0
  %633 = vmatprep.subr.mxu0 0.0
  %634 = vmatpush1.msra.mxu0 0.0
  %635 = vmatprep.subr.mxu0 0.0
  %636 = vmatpush1.msra.mxu0 0.0
  %637 = vmatprep.subr.mxu0 0.0
  %638 = vmatpush1.msra.mxu0 0.0
  %639 = vmatprep.subr.mxu0 0.0
  %640 = vmatpush1.msra.mxu0 0.0
  %641 = vmatprep.subr.mxu0 0.0
  %642 = vmatpush1.msra.mxu0 0.0
  %643 = vmatprep.subr.mxu0 0.0
  %644 = vmatpush1.msra.mxu0 0.0
  %645 = vmatprep.mubr.f32.mxu0 0.0
  %646 = vmatmul.mubr.f32.gmra.mrb[0].mxu0 %v579
  %v647 = vpop.f32.mrb[0].mxu0
  %v648 = vadd.f32 0.0, %v647
  %v649 = vpop.f32.mrb[0].mxu0
  %650 = vdwg.mxu0
  %v651 = vadd.f32 %v60, %v648
  %v652 = vxor.u32 %v651, 2147483648
  %v653 = vmul.f32 %v652, 1.442695
  %v654 = vpow.pop %v653
  %v655 = vadd.f32 %v654, 1.0
  %v656 = vrcp.pop %v655
  %v657 = vmul.f32 1.0, %v656
  %v658 = vtanh.pop %v651
  %v659 = vmul.f32 %v657, %v569
  %661 = vrot.lane.b32.xlu0 %v658, 104
  %v662 = vpop.permute.xlu0 %661
  %v664 = vmul.f32 %v657, %v662
  %666 = vrot.lane.b32.xlu0 %v664, 12
  %v667 = vpop.permute.xlu0 %666
  %v669 = vadd.f32 %v659, %v667
  %v670 = vtanh.pop %v669
  %672 = vrot.lane.b32.xlu0 %v670, 24
  %v673 = vpop.permute.xlu0 %672
  %v675 = vmul.f32 %v657, %v673
  %677 = vrot.lane.b32.xlu0 %v675, 92
  %v678 = vpop.permute.xlu0 %677
  %v679 = vsel %vm73, %v678, 0
  %681 = vmatprep.subr.mxu0 0.0
  %682 = vmatpush1.msra.mxu0 %v11
  %683 = vmatprep.subr.mxu0 0.0
  %684 = vmatpush1.msra.mxu0 %v79
  %685 = vmatprep.subr.mxu0 0.0
  %686 = vmatpush1.msra.mxu0 0.0
  %687 = vmatprep.subr.mxu0 0.0
  %688 = vmatpush1.msra.mxu0 0.0
  %689 = vmatprep.subr.mxu0 0.0
  %690 = vmatpush1.msra.mxu0 0.0
  %691 = vmatprep.subr.mxu0 0.0
  %692 = vmatpush1.msra.mxu0 0.0
  %693 = vmatprep.subr.mxu0 0.0
  %694 = vmatpush1.msra.mxu0 0.0
  %695 = vmatprep.subr.mxu0 0.0
  %696 = vmatpush1.msra.mxu0 0.0
  %697 = vmatprep.subr.mxu0 0.0
  %698 = vmatpush1.msra.mxu0 0.0
  %699 = vmatprep.subr.mxu0 0.0
  %700 = vmatpush1.msra.mxu0 0.0
  %701 = vmatprep.subr.mxu0 0.0
  %702 = vmatpush1.msra.mxu0 0.0
  %703 = vmatprep.subr.mxu0 0.0
  %704 = vmatpush1.msra.mxu0 0.0
  %705 = vmatprep.subr.mxu0 0.0
  %706 = vmatpush1.msra.mxu0 0.0
  %707 = vmatprep.subr.mxu0 0.0
  %708 = vmatpush1.msra.mxu0 0.0
  %709 = vmatprep.subr.mxu0 0.0
  %710 = vmatpush1.msra.mxu0 0.0
  %711 = vmatprep.subr.mxu0 0.0
  %712 = vmatpush1.msra.mxu0 0.0
  %713 = vmatprep.subr.mxu0 0.0
  %714 = vmatpush1.msra.mxu0 0.0
  %715 = vmatprep.subr.mxu0 0.0
  %716 = vmatpush1.msra.mxu0 0.0
  %717 = vmatprep.subr.mxu0 0.0
  %718 = vmatpush1.msra.mxu0 0.0
  %719 = vmatprep.subr.mxu0 0.0
  %720 = vmatpush1.msra.mxu0 0.0
  %721 = vmatprep.subr.mxu0 0.0
  %722 = vmatpush1.msra.mxu0 0.0
  %723 = vmatprep.subr.mxu0 0.0
  %724 = vmatpush1.msra.mxu0 0.0
  %725 = vmatprep.subr.mxu0 0.0
  %726 = vmatpush1.msra.mxu0 0.0
  %727 = vmatprep.subr.mxu0 0.0
  %728 = vmatpush1.msra.mxu0 0.0
  %729 = vmatprep.subr.mxu0 0.0
  %730 = vmatpush1.msra.mxu0 0.0
  %731 = vmatprep.subr.mxu0 0.0
  %732 = vmatpush1.msra.mxu0 0.0
  %733 = vmatprep.subr.mxu0 0.0
  %734 = vmatpush1.msra.mxu0 0.0
  %735 = vmatprep.subr.mxu0 0.0
  %736 = vmatpush1.msra.mxu0 0.0
  %737 = vmatprep.subr.mxu0 0.0
  %738 = vmatpush1.msra.mxu0 0.0
  %739 = vmatprep.subr.mxu0 0.0
  %740 = vmatpush1.msra.mxu0 0.0
  %741 = vmatprep.subr.mxu0 0.0
  %742 = vmatpush1.msra.mxu0 0.0
  %743 = vmatprep.subr.mxu0 0.0
  %744 = vmatpush1.msra.mxu0 0.0
  %745 = vmatprep.mubr.f32.mxu0 0.0
  %746 = vmatmul.mubr.f32.gmra.mrb[0].mxu0 %v679
  %v747 = vpop.f32.mrb[0].mxu0
  %v748 = vadd.f32 0.0, %v747
  %v749 = vpop.f32.mrb[0].mxu0
  %750 = vdwg.mxu0
  %v751 = vadd.f32 %v66, %v748
  %v752 = vxor.u32 %v751, 2147483648
  %v753 = vmul.f32 %v752, 1.442695
  %v754 = vpow.pop %v753
  %v755 = vadd.f32 %v754, 1.0
  %v756 = vrcp.pop %v755
  %v757 = vmul.f32 1.0, %v756
  %v758 = vtanh.pop %v751
  %v759 = vmul.f32 %v757, %v669
  %761 = vrot.lane.b32.xlu0 %v758, 104
  %v762 = vpop.permute.xlu0 %761
  %v764 = vmul.f32 %v757, %v762
  %766 = vrot.lane.b32.xlu0 %v764, 12
  %v767 = vpop.permute.xlu0 %766
  %v769 = vadd.f32 %v759, %v767
  %v770 = vtanh.pop %v769
  %772 = vrot.lane.b32.xlu0 %v770, 24
  %v773 = vpop.permute.xlu0 %772
  %v775 = vmul.f32 %v757, %v773
  %777 = vrot.lane.b32.xlu0 %v775, 92
  %v778 = vpop.permute.xlu0 %777
  %v779 = vsel %vm73, %v778, 0
  %781 = vmatprep.subr.mxu0 0.0
  %782 = vmatpush1.msra.mxu0 %v11
  %783 = vmatprep.subr.mxu0 0.0
  %784 = vmatpush1.msra.mxu0 %v79
  %785 = vmatprep.subr.mxu0 0.0
  %786 = vmatpush1.msra.mxu0 0.0
  %787 = vmatprep.subr.mxu0 0.0
  %788 = vmatpush1.msra.mxu0 0.0
  %789 = vmatprep.subr.mxu0 0.0
  %790 = vmatpush1.msra.mxu0 0.0
  %791 = vmatprep.subr.mxu0 0.0
  %792 = vmatpush1.msra.mxu0 0.0
  %793 = vmatprep.subr.mxu0 0.0
  %794 = vmatpush1.msra.mxu0 0.0
  %795 = vmatprep.subr.mxu0 0.0
  %796 = vmatpush1.msra.mxu0 0.0
  %797 = vmatprep.subr.mxu0 0.0
  %798 = vmatpush1.msra.mxu0 0.0
  %799 = vmatprep.subr.mxu0 0.0
  %800 = vmatpush1.msra.mxu0 0.0
  %801 = vmatprep.subr.mxu0 0.0
  %802 = vmatpush1.msra.mxu0 0.0
  %803 = vmatprep.subr.mxu0 0.0
  %804 = vmatpush1.msra.mxu0 0.0
  %805 = vmatprep.subr.mxu0 0.0
  %806 = vmatpush1.msra.mxu0 0.0
  %807 = vmatprep.subr.mxu0 0.0
  %808 = vmatpush1.msra.mxu0 0.0
  %809 = vmatprep.subr.mxu0 0.0
  %810 = vmatpush1.msra.mxu0 0.0
  %811 = vmatprep.subr.mxu0 0.0
  %812 = vmatpush1.msra.mxu0 0.0
  %813 = vmatprep.subr.mxu0 0.0
  %814 = vmatpush1.msra.mxu0 0.0
  %815 = vmatprep.subr.mxu0 0.0
  %816 = vmatpush1.msra.mxu0 0.0
  %817 = vmatprep.subr.mxu0 0.0
  %818 = vmatpush1.msra.mxu0 0.0
  %819 = vmatprep.subr.mxu0 0.0
  %820 = vmatpush1.msra.mxu0 0.0
  %821 = vmatprep.subr.mxu0 0.0
  %822 = vmatpush1.msra.mxu0 0.0
  %823 = vmatprep.subr.mxu0 0.0
  %824 = vmatpush1.msra.mxu0 0.0
  %825 = vmatprep.subr.mxu0 0.0
  %826 = vmatpush1.msra.mxu0 0.0
  %827 = vmatprep.subr.mxu0 0.0
  %828 = vmatpush1.msra.mxu0 0.0
  %829 = vmatprep.subr.mxu0 0.0
  %830 = vmatpush1.msra.mxu0 0.0
  %831 = vmatprep.subr.mxu0 0.0
  %832 = vmatpush1.msra.mxu0 0.0
  %833 = vmatprep.subr.mxu0 0.0
  %834 = vmatpush1.msra.mxu0 0.0
  %835 = vmatprep.subr.mxu0 0.0
  %836 = vmatpush1.msra.mxu0 0.0
  %837 = vmatprep.subr.mxu0 0.0
  %838 = vmatpush1.msra.mxu0 0.0
  %839 = vmatprep.subr.mxu0 0.0
  %840 = vmatpush1.msra.mxu0 0.0
  %841 = vmatprep.subr.mxu0 0.0
  %842 = vmatpush1.msra.mxu0 0.0
  %843 = vmatprep.subr.mxu0 0.0
  %844 = vmatpush1.msra.mxu0 0.0
  %845 = vmatprep.mubr.f32.mxu0 0.0
  %846 = vmatmul.mubr.f32.gmra.mrb[0].mxu0 %v779
  %v847 = vpop.f32.mrb[0].mxu0
  %v848 = vadd.f32 0.0, %v847
  %v849 = vpop.f32.mrb[0].mxu0
  %850 = vdwg.mxu0
  %v851 = vadd.f32 %v72, %v848
  %v852 = vxor.u32 %v851, 2147483648
  %v853 = vmul.f32 %v852, 1.442695
  %v854 = vpow.pop %v853
  %v855 = vadd.f32 %v854, 1.0
  %v856 = vrcp.pop %v855
  %v857 = vmul.f32 1.0, %v856
  %v858 = vtanh.pop %v851
  %v859 = vmul.f32 %v857, %v769
  %861 = vrot.lane.b32.xlu0 %v858, 104
  %v862 = vpop.permute.xlu0 %861
  %v864 = vmul.f32 %v857, %v862
  %866 = vrot.lane.b32.xlu0 %v864, 12
  %v867 = vpop.permute.xlu0 %866
  %v869 = vadd.f32 %v859, %v867
  %v870 = vtanh.pop %v869
  %872 = vrot.lane.b32.xlu0 %v870, 24
  %v873 = vpop.permute.xlu0 %872
  %v875 = vmul.f32 %v857, %v873
  %v876 = vld [vmem:[%s1 + $0xe] sm:$0x1]
  %v877 = vld [vmem:[%s1 + $0xf] sm:$0x1]
  %v878 = vlaneseq
  %v879 = vshrl.u32 %v878, 7
  %v880 = vsub.s32 0, %v879
  %v881 = vrot.slane %v876, %v880
  %v882 = vmul.f32 %v69, %v881
  %v883 = vlaneseq
  %v884 = vshrl.u32 %v883, 7
  %v885 = vsub.s32 0, %v884
  %v886 = vrot.slane %v877, %v885
  %v887 = vadd.f32 %v882, %v886
  %v888 = vxor.u32 %v887, 2147483648
  %v889 = vmul.f32 %v888, 1.442695
  %v890 = vpow.pop %v889
  %v891 = vadd.f32 %v890, 1.0
  %v892 = vrcp.pop %v891
  %v893 = vmul.f32 1.0, %v892
  %v894 = vtanh.pop %v887
  %896 = vrot.lane.b32.xlu0 %v894, 104
  %v897 = vpop.permute.xlu0 %896
  %v899 = vmul.f32 %v893, %v897
  %v900 = vtanh.pop %v899
  %902 = vrot.lane.b32.xlu0 %v900, 36
  %v903 = vpop.permute.xlu0 %902
  %v905 = vmul.f32 %v893, %v903
  %v906 = vld [vmem:[%s1 + $0x10] sm:$0xff]
  %v907 = vld [vmem:[%s1 + $0x18] sm:$0xff]
  %v908 = vld [vmem:[%s1 + $0x20] sm:$0xff]
  %v909 = vld [vmem:[%s1 + $0x28] sm:$0xff]
  %v910 = vld [vmem:[%s1 + $0x30] sm:$0xf]
  %v911 = vld [vmem:[%s1 + $0x34] sm:$0x1]
  %v912 = vld [vmem:[%s1 + $0x35] sm:$0x1]
  %914 = vrot.lane.b32.xlu0 %v875, 92
  %v915 = vpop.permute.xlu0 %914
  %918 = vrot.lane.b32.xlu0 %v905, 104
  %v919 = vpop.permute.xlu0 %918
  %v921 = vsel %vm73, %v915, %v919
  %v922 = vlaneseq
  %v923 = vshrl.u32 %v922, 7
  %v924 = vsub.s32 0, %v923
  %v925 = vrot.slane %v911, %v924
  %vm926 = vcmask 195584
  %v928 = vsel %vm926, %v921, 0
  %930 = vmatprep.subr.mxu0 0.0
  %931 = vmatpush1.msra.mxu0 %v906
  %932 = vmatprep.subr.mxu0 0.0
  %933 = vmatpush1.msra.mxu0 %v907
  %934 = vmatprep.subr.mxu0 0.0
  %935 = vmatpush1.msra.mxu0 %v908
  %936 = vmatprep.subr.mxu0 0.0
  %937 = vmatpush1.msra.mxu0 0.0
  %938 = vmatprep.subr.mxu0 0.0
  %939 = vmatpush1.msra.mxu0 0.0
  %940 = vmatprep.subr.mxu0 0.0
  %941 = vmatpush1.msra.mxu0 0.0
  %942 = vmatprep.subr.mxu0 0.0
  %943 = vmatpush1.msra.mxu0 0.0
  %944 = vmatprep.subr.mxu0 0.0
  %945 = vmatpush1.msra.mxu0 0.0
  %946 = vmatprep.subr.mxu0 0.0
  %947 = vmatpush1.msra.mxu0 0.0
  %948 = vmatprep.subr.mxu0 0.0
  %949 = vmatpush1.msra.mxu0 0.0
  %950 = vmatprep.subr.mxu0 0.0
  %951 = vmatpush1.msra.mxu0 0.0
  %952 = vmatprep.subr.mxu0 0.0
  %953 = vmatpush1.msra.mxu0 0.0
  %954 = vmatprep.subr.mxu0 0.0
  %955 = vmatpush1.msra.mxu0 0.0
  %956 = vmatprep.subr.mxu0 0.0
  %957 = vmatpush1.msra.mxu0 0.0
  %958 = vmatprep.subr.mxu0 0.0
  %959 = vmatpush1.msra.mxu0 0.0
  %960 = vmatprep.subr.mxu0 0.0
  %961 = vmatpush1.msra.mxu0 0.0
  %962 = vmatprep.subr.mxu0 0.0
  %963 = vmatpush1.msra.mxu0 0.0
  %964 = vmatprep.subr.mxu0 0.0
  %965 = vmatpush1.msra.mxu0 0.0
  %966 = vmatprep.subr.mxu0 0.0
  %967 = vmatpush1.msra.mxu0 0.0
  %968 = vmatprep.subr.mxu0 0.0
  %969 = vmatpush1.msra.mxu0 0.0
  %970 = vmatprep.subr.mxu0 0.0
  %971 = vmatpush1.msra.mxu0 0.0
  %972 = vmatprep.subr.mxu0 0.0
  %973 = vmatpush1.msra.mxu0 0.0
  %974 = vmatprep.subr.mxu0 0.0
  %975 = vmatpush1.msra.mxu0 0.0
  %976 = vmatprep.subr.mxu0 0.0
  %977 = vmatpush1.msra.mxu0 0.0
  %978 = vmatprep.subr.mxu0 0.0
  %979 = vmatpush1.msra.mxu0 0.0
  %980 = vmatprep.subr.mxu0 0.0
  %981 = vmatpush1.msra.mxu0 0.0
  %982 = vmatprep.subr.mxu0 0.0
  %983 = vmatpush1.msra.mxu0 0.0
  %984 = vmatprep.subr.mxu0 0.0
  %985 = vmatpush1.msra.mxu0 0.0
  %986 = vmatprep.subr.mxu0 0.0
  %987 = vmatpush1.msra.mxu0 0.0
  %988 = vmatprep.subr.mxu0 0.0
  %989 = vmatpush1.msra.mxu0 0.0
  %990 = vmatprep.subr.mxu0 0.0
  %991 = vmatpush1.msra.mxu0 0.0
  %992 = vmatprep.subr.mxu0 0.0
  %993 = vmatpush1.msra.mxu0 0.0
  %994 = vmatprep.mubr.f32.mxu0 0.0
  %995 = vmatmul.mubr.f32.gmra.mrb[0].mxu0 %v928
  %v996 = vpop.f32.mrb[0].mxu0
  %v997 = vadd.f32 %v925, %v996
  %v998 = vpop.f32.mrb[0].mxu0
  %999 = vdwg.mxu0
  %v1000 = vmax.f32 %v997, 0.0
  %v1001 = vlaneseq
  %v1002 = vshrl.u32 %v1001, 7
  %v1003 = vsub.s32 0, %v1002
  %v1004 = vrot.slane %v912, %v1003
  %v1006 = vsel %vm73, %v1000, 0
  %v1009 = vsel %vm77, %v910, 0
  %1011 = vmatprep.subr.mxu0 0.0
  %1012 = vmatpush1.msra.mxu0 %v909
  %1013 = vmatprep.subr.mxu0 0.0
  %1014 = vmatpush1.msra.mxu0 %v1009
  %1015 = vmatprep.subr.mxu0 0.0
  %1016 = vmatpush1.msra.mxu0 0.0
  %1017 = vmatprep.subr.mxu0 0.0
  %1018 = vmatpush1.msra.mxu0 0.0
  %1019 = vmatprep.subr.mxu0 0.0
  %1020 = vmatpush1.msra.mxu0 0.0
  %1021 = vmatprep.subr.mxu0 0.0
  %1022 = vmatpush1.msra.mxu0 0.0
  %1023 = vmatprep.subr.mxu0 0.0
  %1024 = vmatpush1.msra.mxu0 0.0
  %1025 = vmatprep.subr.mxu0 0.0
  %1026 = vmatpush1.msra.mxu0 0.0
  %1027 = vmatprep.subr.mxu0 0.0
  %1028 = vmatpush1.msra.mxu0 0.0
  %1029 = vmatprep.subr.mxu0 0.0
  %1030 = vmatpush1.msra.mxu0 0.0
  %1031 = vmatprep.subr.mxu0 0.0
  %1032 = vmatpush1.msra.mxu0 0.0
  %1033 = vmatprep.subr.mxu0 0.0
  %1034 = vmatpush1.msra.mxu0 0.0
  %1035 = vmatprep.subr.mxu0 0.0
  %1036 = vmatpush1.msra.mxu0 0.0
  %1037 = vmatprep.subr.mxu0 0.0
  %1038 = vmatpush1.msra.mxu0 0.0
  %1039 = vmatprep.subr.mxu0 0.0
  %1040 = vmatpush1.msra.mxu0 0.0
  %1041 = vmatprep.subr.mxu0 0.0
  %1042 = vmatpush1.msra.mxu0 0.0
  %1043 = vmatprep.subr.mxu0 0.0
  %1044 = vmatpush1.msra.mxu0 0.0
  %1045 = vmatprep.subr.mxu0 0.0
  %1046 = vmatpush1.msra.mxu0 0.0
  %1047 = vmatprep.subr.mxu0 0.0
  %1048 = vmatpush1.msra.mxu0 0.0
  %1049 = vmatprep.subr.mxu0 0.0
  %1050 = vmatpush1.msra.mxu0 0.0
  %1051 = vmatprep.subr.mxu0 0.0
  %1052 = vmatpush1.msra.mxu0 0.0
  %1053 = vmatprep.subr.mxu0 0.0
  %1054 = vmatpush1.msra.mxu0 0.0
  %1055 = vmatprep.subr.mxu0 0.0
  %1056 = vmatpush1.msra.mxu0 0.0
  %1057 = vmatprep.subr.mxu0 0.0
  %1058 = vmatpush1.msra.mxu0 0.0
  %1059 = vmatprep.subr.mxu0 0.0
  %1060 = vmatpush1.msra.mxu0 0.0
  %1061 = vmatprep.subr.mxu0 0.0
  %1062 = vmatpush1.msra.mxu0 0.0
  %1063 = vmatprep.subr.mxu0 0.0
  %1064 = vmatpush1.msra.mxu0 0.0
  %1065 = vmatprep.subr.mxu0 0.0
  %1066 = vmatpush1.msra.mxu0 0.0
  %1067 = vmatprep.subr.mxu0 0.0
  %1068 = vmatpush1.msra.mxu0 0.0
  %1069 = vmatprep.subr.mxu0 0.0
  %1070 = vmatpush1.msra.mxu0 0.0
  %1071 = vmatprep.subr.mxu0 0.0
  %1072 = vmatpush1.msra.mxu0 0.0
  %1073 = vmatprep.subr.mxu0 0.0
  %1074 = vmatpush1.msra.mxu0 0.0
  %1075 = vmatprep.mubr.f32.mxu0 0.0
  %1076 = vmatmul.mubr.f32.gmra.mrb[0].mxu0 %v1006
  %v1077 = vpop.f32.mrb[0].mxu0
  %v1078 = vadd.f32 %v1004, %v1077
  %v1079 = vpop.f32.mrb[0].mxu0
  %1080 = vdwg.mxu0
  %v1081 = vmul.f32 %v1078, 0.5
  %v1082 = vmul.f32 %v1081, 1.442695
  %v1083 = vpow.pop %v1082
  %1085 = vrot.lane.b32.xlu0 %v1083, 124
  %v1086 = vpop.permute.xlu0 %1085
  %v1088 = vmul.f32 %v15, %v1086
  %1090 = vrot.lane.b32.xlu0 %v1078, 8
  %v1091 = vpop.permute.xlu0 %1090
  %v1093 = vadd.f32 %v1088, %v1091
  %1095 = vrot.lane.b32.xlu0 %v1093, 120
  %v1096 = vpop.permute.xlu0 %1095
  %1098 = vrot.lane.b32.xlu0 %v1078, 12
  %v1099 = vpop.permute.xlu0 %1098
  %v1101 = vsel %vm73, %v1096, %v1099
  %v1102 = vsel %vm926, %v1101, %v1099
  %vm1103 = vcmask 287744
  %1104 = vst.msk [vmem:[%s2] sm:$0x3] %vm1103, %v1102
  // Predicated region
  $region10: #{encoder_forward.1} parent=0 // pred_check
    _
  $region11: #{encoder_forward.1} parent=0 // pred_check_branch
    %1106 = sbr.rel (0) target = $region13
  $region12: #{encoder_forward.1} parent=0 // pred_region
    _
  $region13: #{encoder_forward.1} parent=0 // pred_fallthru
    _
  // Predicated region
  $region14: #{encoder_forward.1} parent=0 // pred_check
    _
  $region15: #{encoder_forward.1} parent=0 // pred_check_branch
    %1108 = sbr.rel (0) target = $region17
  $region16: #{encoder_forward.1} parent=0 // pred_region
    _
  $region17: #{encoder_forward.1} parent=0 // pred_fallthru
    _

</llo_original>
